<compile_context>
chip_gen: v5e
topology: v5e:2x2
jax: 0.10.0
libtpu: 0.0.40
codegen_flags: <defaults>
</compile_context>

<pallas_src>
import functools

import jax
import jax.numpy as jnp
from jax import lax
from jax.experimental import pallas as pl
from jax.experimental.pallas import tpu as pltpu

D_PAD = 128      # feature dim zero padded to a full lane width
A_PAD = 128      # concatenated proxy-column axis padded to a full lane width
NEG_INF = -1e30  # segment mask value for the per-segment logsumexp


# --------------------------- fused forward kernel ----------------------------

def _coop_proxy_kernel(img_ref,      # (B, C*H*W) f32
                       w_ref,        # (C*H*W, D_PAD) f32  fused GAP+projection weight
                       b_ref,        # (1, D_PAD) f32      projection bias (zero padded)
                       proxeff_ref,  # (D_PAD, A_PAD) f32  prox^T * mask^2
                       masksq_ref,   # (D_PAD, A_PAD) f32  mask^2 per column
                       p2_ref,       # (1, A_PAD) f32      sum_d (prox*mask)^2
                       ycatt_ref,    # (D_PAD, B) f32      per-example supercenters^T
                       p2c_ref,      # (1, B) f32          ||supercenter[cats[j]]||^2
                       ohia_ref,     # (B, A_PAD) f32      one-hot item+attr targets
                       ohcat_ref,    # (B, B) f32          one-hot category targets
                       mscaled_ref,  # (n_attr, B, 1) f32  m_attr / (norm + 1e-8)
                       out_ref,      # (1, 128) f32 -> [mean ip, mean cp, mean mm, reg_e, 0...]
                       *, B, NI, attr_sizes):
    f32 = jnp.float32
    n_attr = len(attr_sizes)

    # --- model(images): fused global-average-pool + linear projection --------
    emb = jnp.dot(img_ref[...], w_ref[...], preferred_element_type=f32) + b_ref[...]  # (B, D_PAD)

    # --- shared masked squared-distance matrix for item + all attribute losses
    #     dist2[b, j] = || m_j*emb_b - m_j*prox_j ||^2 with all parameter-only
    #     factors precomputed at pack time.
    cross = jnp.dot(emb, proxeff_ref[...], preferred_element_type=f32)       # (B, A_PAD)
    e2 = jnp.dot(emb * emb, masksq_ref[...], preferred_element_type=f32)     # (B, A_PAD)
    dist2 = e2 + p2_ref[...] - 2.0 * cross                                   # (B, A_PAD)

    # --- column iota + static segment masks, built once, reused by every CE --
    cols = lax.broadcasted_iota(jnp.int32, (B, A_PAD), 1)
    seg_item = cols < NI
    seg_attr = []
    off = NI
    for sz in attr_sizes:
        seg_attr.append(jnp.logical_and(cols >= off, cols < off + sz))
        off += sz

    oh_ia = ohia_ref[...]

    def ce_seg(logits, in_seg):
        """Per-row CrossEntropyLoss(reduce=False) over one column segment."""
        lm = jnp.where(in_seg, logits, NEG_INF)
        row_max = jnp.max(lm, axis=1, keepdims=True)
        p = jnp.where(in_seg, jnp.exp(lm - row_max), 0.0)
        lse = row_max + jnp.log(jnp.sum(p, axis=1, keepdims=True))
        sel = jnp.sum(jnp.where(in_seg, oh_ia * logits, 0.0), axis=1, keepdims=True)
        return lse - sel                                                     # (B, 1)

    # --- item proxy loss: logits = -||emb - noun_j||^2 over columns [0, NI) --
    loss_ip = ce_seg(-dist2, seg_item)                                       # (B, 1)

    # --- category proxy loss (supercenters gathered in the wrapper) ----------
    # NOTE: faithful to the PyTorch (B,1,D)-(B,D) broadcast quirk -- logits columns
    # index per-example selected supercenters while labels are category ids
    # (valid only because num_cats <= B, exactly like the reference).
    e2_full = e2[:, 0:1]                                                     # ||emb||^2 (ones-mask col)
    cross_c = jnp.dot(emb, ycatt_ref[...], preferred_element_type=f32)       # (B, B)
    logits_c = -(e2_full + p2c_ref[...] - 2.0 * cross_c)                     # (B, B)
    rm = jnp.max(logits_c, axis=1, keepdims=True)
    lse_c = rm + jnp.log(jnp.sum(jnp.exp(logits_c - rm), axis=1, keepdims=True))
    sel_c = jnp.sum(ohcat_ref[...] * logits_c, axis=1, keepdims=True)
    loss_cp = lse_c - sel_c                                                  # (B, 1)

    # --- attribute losses (cond_net masks folded into dist2; normalization
    #     folded into mscaled in the wrapper). Double negation in the reference:
    #     criterion(-(-dist^2)) -> logits = +dist^2.
    loss_mm = jnp.zeros((B, 1), f32)
    for i in range(n_attr):
        loss_m = ce_seg(dist2, seg_attr[i])                                  # (B, 1)
        loss_mm = loss_mm + mscaled_ref[i] * loss_m

    # --- embedding L2 regularizer --------------------------------------------
    rnorm = jnp.sqrt(e2_full)                                                # (B, 1)

    # --- pack per-example results as lanes, reduce the batch on the MXU ------
    slab = (jnp.where(cols == 0, loss_ip, 0.0)
            + jnp.where(cols == 1, loss_cp, 0.0)
            + jnp.where(cols == 2, loss_mm, 0.0)
            + jnp.where(cols == 3, rnorm, 0.0))                              # (B, 128)
    mean_w = jnp.full((1, B), 1.0 / B, f32)
    out_ref[...] = jnp.dot(mean_w, slab, preferred_element_type=f32)         # (1, 128)


# --------------------------- parameters & static packing ---------------------

def init_params(key, *, C, D, num_items, num_cats, attr_sizes):
    n_attr = len(attr_sizes)
    ks = jax.random.split(key, 4 + n_attr)
    params = {
        "model_w": jax.random.normal(ks[0], (C, D), jnp.float32) * 0.1,
        "model_b": jax.random.normal(ks[1], (D,), jnp.float32) * 0.01,
        "noun_proxies": jax.random.normal(ks[2], (num_items, D), jnp.float32),
        "adj_proxies": [jax.random.normal(ks[3 + i], (sz, D), jnp.float32)
                        for i, sz in enumerate(attr_sizes)],
        "cond_masks": jax.nn.sigmoid(
            jax.random.normal(ks[3 + n_attr], (n_attr, D), jnp.float32)),
    }
    # csm: (num_items, num_cats) binary item->category matrix, every category non-empty
    csm = jnp.zeros((num_items, num_cats), jnp.float32)
    csm = csm.at[jnp.arange(num_items), jnp.arange(num_items) % num_cats].set(1.0)
    params["csm"] = csm
    return params


def pack_params(params, *, C, H, W, D, num_items, num_cats, attr_sizes):
    """Static, once-per-training prep: fuse GAP+projection, pad D to 128 lanes,
    precompute masked proxy tables, proxy column norms and supercenters."""
    a_real = num_items + sum(attr_sizes)
    assert D <= D_PAD and a_real <= A_PAD
    f32 = jnp.float32

    # GAP expressed as a matmul, then folded into the projection weight.
    gap_w = jnp.repeat(jnp.eye(C, dtype=f32), H * W, axis=0) / float(H * W)   # (CHW, C)
    model_w = jnp.pad(params["model_w"].astype(f32), ((0, 0), (0, D_PAD - D)))
    fused_w = gap_w @ model_w                                                 # (CHW, D_PAD)
    model_b = jnp.pad(params["model_b"].astype(f32)[None, :],
                      ((0, 0), (0, D_PAD - D)))                               # (1, D_PAD)

    # concatenated proxy table (transposed: D on sublanes, proxy columns on lanes)
    cols = [params["noun_proxies"].astype(f32).T]                             # (D, NI)
    mask_cols = [jnp.ones((D, num_items), f32)]                               # ones mask for nouns
    for i, sz in enumerate(attr_sizes):
        cols.append(params["adj_proxies"][i].astype(f32).T)                   # (D, sz)
        mask_cols.append(jnp.broadcast_to(
            params["cond_masks"][i].astype(f32)[:, None], (D, sz)))
    prox_t = jnp.pad(jnp.concatenate(cols, axis=1),
                     ((0, D_PAD - D), (0, A_PAD - a_real)))                   # (D_PAD, A_PAD)
    mask_t = jnp.pad(jnp.concatenate(mask_cols, axis=1),
                     ((0, D_PAD - D), (0, A_PAD - a_real)))

    mask_sq_t = mask_t * mask_t                                               # (D_PAD, A_PAD)
    prox_eff_t = prox_t * mask_sq_t                                           # (D_PAD, A_PAD)
    p2 = jnp.sum((prox_t * mask_t) ** 2, axis=0, keepdims=True)               # (1, A_PAD)

    # create_supercenters(): per-category mean of noun proxies (pack-time matmul)
    csm = params["csm"].astype(f32)
    counts = jnp.sum(csm, axis=0)
    sup = (csm / counts[None, :]).T @ params["noun_proxies"].astype(f32)      # (NC, D)
    sup_pad = jnp.pad(sup, ((0, 0), (0, D_PAD - D)))                          # (NC, D_PAD)
    sup_norm2 = jnp.sum(sup * sup, axis=1)                                    # (NC,)

    return {"fused_w": fused_w, "model_b": model_b,
            "prox_eff_t": prox_eff_t, "mask_sq_t": mask_sq_t, "p2": p2,
            "sup_pad": sup_pad, "sup_norm2": sup_norm2}


# --------------------------- forward (single pallas_call) --------------------

def coop_proxy_loss_forward(packed, images, labels, masks, *,
                            num_items, num_cats, attr_sizes):
    items, cats, attrs = labels[0], labels[1], labels[2:]
    _m_cats = masks[0]            # present in the reference signature but unused there
    m_attrs = masks[1:]
    assert len(attrs) == len(attr_sizes) == len(m_attrs)

    B, C, H, W = images.shape
    chw = C * H * W
    n_attr = len(attr_sizes)
    f32 = jnp.float32

    img_flat = images.reshape(B, chw).astype(f32)

    # one-hot target matrices (replaces in-kernel SMEM label builders)
    col_ids = jnp.arange(A_PAD, dtype=jnp.int32)[None, :]
    oh_ia = (col_ids == items.astype(jnp.int32)[:, None]).astype(f32)         # (B, A_PAD)
    off = num_items
    for i, sz in enumerate(attr_sizes):
        oh_ia = oh_ia + (col_ids == (off + attrs[i].astype(jnp.int32))[:, None]).astype(f32)
        off += sz
    oh_cats = (jnp.arange(B, dtype=jnp.int32)[None, :]
               == cats.astype(jnp.int32)[:, None]).astype(f32)                # (B, B)

    # per-example gathered supercenters (category-loss quirk handled here)
    y_cat_t = packed["sup_pad"][cats].T                                       # (D_PAD, B)
    p2_c = packed["sup_norm2"][cats][None, :]                                 # (1, B)

    # attribute weights with the 1/(norm + 1e-8) normalization folded in
    m_attr_mat = jnp.stack([m.astype(f32) for m in m_attrs], axis=1)          # (B, n_attr)
    norm = jnp.sum(m_attr_mat, axis=1, keepdims=True)
    m_scaled = (m_attr_mat / (norm + 1e-8)).T[:, :, None]                     # (n_attr, B, 1)

    kernel = functools.partial(_coop_proxy_kernel, B=B, NI=num_items,
                               attr_sizes=tuple(attr_sizes))

    out = pl.pallas_call(
        kernel,
        grid=(1,),
        in_specs=[
            pl.BlockSpec((B, chw), lambda i: (0, 0)),
            pl.BlockSpec((chw, D_PAD), lambda i: (0, 0)),
            pl.BlockSpec((1, D_PAD), lambda i: (0, 0)),
            pl.BlockSpec((D_PAD, A_PAD), lambda i: (0, 0)),
            pl.BlockSpec((D_PAD, A_PAD), lambda i: (0, 0)),
            pl.BlockSpec((1, A_PAD), lambda i: (0, 0)),
            pl.BlockSpec((D_PAD, B), lambda i: (0, 0)),
            pl.BlockSpec((1, B), lambda i: (0, 0)),
            pl.BlockSpec((B, A_PAD), lambda i: (0, 0)),
            pl.BlockSpec((B, B), lambda i: (0, 0)),
            pl.BlockSpec((n_attr, B, 1), lambda i: (0, 0, 0)),
        ],
        out_specs=pl.BlockSpec((1, 128), lambda i: (0, 0)),
        out_shape=jax.ShapeDtypeStruct((1, 128), jnp.float32),
        compiler_params=pltpu.CompilerParams(dimension_semantics=("arbitrary",)),
    )(img_flat, packed["fused_w"], packed["model_b"], packed["prox_eff_t"],
      packed["mask_sq_t"], packed["p2"], y_cat_t, p2_c, oh_ia, oh_cats, m_scaled)

    return ([out[0, 0], out[0, 1], out[0, 2]], [out[0, 3]])


# --------------------------- pure-JAX reference (for the self-check) ---------

def reference_forward(params, images, labels, masks):
    items, cats, attrs = labels[0], labels[1], labels[2:]
    m_attrs = masks[1:]
    pooled = jnp.mean(images, axis=(2, 3))
    emb = pooled @ params["model_w"] + params["model_b"][None, :]
    csm = params["csm"]
    sup = (csm / jnp.sum(csm, axis=0)[None, :]).T @ params["noun_proxies"]

    def ce(logits, lab):
        lse = jax.nn.logsumexp(logits, axis=1)
        sel = jnp.take_along_axis(logits, lab[:, None].astype(jnp.int32), axis=1)[:, 0]
        return lse - sel

    d_ip = -jnp.sum((emb[:, None, :] - params["noun_proxies"][None, :, :]) ** 2, axis=2)
    loss_ip = ce(d_ip, items)
    ycat = sup[cats]
    d_cp = -jnp.sum((emb[:, None, :] - ycat[None, :, :]) ** 2, axis=2)
    loss_cp = ce(d_cp, cats)
    norm = jnp.sum(jnp.stack(m_attrs, axis=1), axis=1)
    loss_mm = jnp.zeros_like(norm)
    for i in range(len(m_attrs)):
        m = params["cond_masks"][i]
        mx = emb * m[None, :]
        mz = params["adj_proxies"][i] * m[None, :]
        d = jnp.sum((mx[:, None, :] - mz[None, :, :]) ** 2, axis=2)
        loss_mm = loss_mm + m_attrs[i] * (ce(d, attrs[i]) / (norm + 1e-8))
    reg = jnp.mean(jnp.sqrt(jnp.sum(emb * emb, axis=1)))
    return jnp.stack([loss_ip.mean(), loss_cp.mean(), loss_mm.mean(), reg])


# --------------------------- demo --------------------------------------------

if __name__ == "__main__":
    B, C, H, W = 8, 4, 16, 16
    D = 32
    NUM_ITEMS, NUM_CATS = 16, 8          # NUM_CATS <= B keeps the reference's (B,B) cat logits valid
    ATTR_SIZES = [4, 6, 5]

    key = jax.random.PRNGKey(0)
    k_param, k_img, k_items, k_cats, k_attr, k_mask = jax.random.split(key, 6)
    params = init_params(k_param, C=C, D=D, num_items=NUM_ITEMS,
                         num_cats=NUM_CATS, attr_sizes=ATTR_SIZES)
    packed = pack_params(params, C=C, H=H, W=W, D=D, num_items=NUM_ITEMS,
                         num_cats=NUM_CATS, attr_sizes=ATTR_SIZES)

    images = jax.random.normal(k_img, (B, C, H, W), jnp.float32)
    items = jax.random.randint(k_items, (B,), 0, NUM_ITEMS)
    cats = jax.random.randint(k_cats, (B,), 0, NUM_CATS)
    attr_keys = jax.random.split(k_attr, len(ATTR_SIZES))
    attrs = [jax.random.randint(attr_keys[i], (B,), 0, ATTR_SIZES[i])
             for i in range(len(ATTR_SIZES))]
    labels = [items, cats] + attrs

    mask_keys = jax.random.split(k_mask, len(ATTR_SIZES) + 1)
    m_cats = jax.random.bernoulli(mask_keys[0], 0.8, (B,)).astype(jnp.float32)
    m_attrs = [jax.random.bernoulli(mask_keys[i + 1], 0.7, (B,)).astype(jnp.float32)
               for i in range(len(ATTR_SIZES))]
    masks = [m_cats] + m_attrs

    fwd = jax.jit(functools.partial(coop_proxy_loss_forward,
                                    num_items=NUM_ITEMS, num_cats=NUM_CATS,
                                    attr_sizes=tuple(ATTR_SIZES)))
    losses, regs = fwd(packed, images, labels, masks)
    jax.block_until_ready(losses)
    jax.block_until_ready(regs)

    got = jnp.stack([losses[0], losses[1], losses[2], regs[0]])
    want = reference_forward(params, images, labels, masks)
    assert all(bool(jnp.isfinite(v)) for v in got)
    assert bool(jnp.allclose(got, want, rtol=5e-3, atol=5e-3)), (got, want)
    print("KERNEL_OK")
</pallas_src>

<mosaic_0001>
module attributes {stable_mosaic.version = 11 : i64} {
  func.func @_coop_proxy_kernel(%arg0: i32, %arg1: memref<8x1024xf32, #tpu.memory_space<vmem>>, %arg2: memref<1024x128xf32, #tpu.memory_space<vmem>>, %arg3: memref<1x128xf32, #tpu.memory_space<vmem>>, %arg4: memref<128x128xf32, #tpu.memory_space<vmem>>, %arg5: memref<128x128xf32, #tpu.memory_space<vmem>>, %arg6: memref<1x128xf32, #tpu.memory_space<vmem>>, %arg7: memref<128x8xf32, #tpu.memory_space<vmem>>, %arg8: memref<1x8xf32, #tpu.memory_space<vmem>>, %arg9: memref<8x128xf32, #tpu.memory_space<vmem>>, %arg10: memref<8x8xf32, #tpu.memory_space<vmem>>, %arg11: memref<3x8x1xf32, #tpu.memory_space<vmem>>, %arg12: memref<1x128xf32, #tpu.memory_space<vmem>>) attributes {dimension_semantics = [#tpu.dimension_semantics<arbitrary>], iteration_bounds = array<i64: 1>, scalar_prefetch = 0 : i64, scratch_operands = 0 : i64, tpu.core_type = #tpu.core_type<tc>, window_params = [{pipeline_mode = #tpu.pipeline_mode<synchronous>, transform_indices = @transform_0, window_bounds = array<i64: 8, 1024>}, {pipeline_mode = #tpu.pipeline_mode<synchronous>, transform_indices = @transform_1, window_bounds = array<i64: 1024, 128>}, {pipeline_mode = #tpu.pipeline_mode<synchronous>, transform_indices = @transform_2, window_bounds = array<i64: 1, 128>}, {pipeline_mode = #tpu.pipeline_mode<synchronous>, transform_indices = @transform_3, window_bounds = array<i64: 128, 128>}, {pipeline_mode = #tpu.pipeline_mode<synchronous>, transform_indices = @transform_4, window_bounds = array<i64: 128, 128>}, {pipeline_mode = #tpu.pipeline_mode<synchronous>, transform_indices = @transform_5, window_bounds = array<i64: 1, 128>}, {pipeline_mode = #tpu.pipeline_mode<synchronous>, transform_indices = @transform_6, window_bounds = array<i64: 128, 8>}, {pipeline_mode = #tpu.pipeline_mode<synchronous>, transform_indices = @transform_7, window_bounds = array<i64: 1, 8>}, {pipeline_mode = #tpu.pipeline_mode<synchronous>, transform_indices = @transform_8, window_bounds = array<i64: 8, 128>}, {pipeline_mode = #tpu.pipeline_mode<synchronous>, transform_indices = @transform_9, window_bounds = array<i64: 8, 8>}, {pipeline_mode = #tpu.pipeline_mode<synchronous>, transform_indices = @transform_10, window_bounds = array<i64: 3, 8, 1>}, {pipeline_mode = #tpu.pipeline_mode<synchronous>, transform_indices = @transform_11, window_bounds = array<i64: 1, 128>}]} {
    %c0 = arith.constant 0 : index
    %c0_0 = arith.constant 0 : index
    %0 = vector.load %arg1[%c0, %c0_0] : memref<8x1024xf32, #tpu.memory_space<vmem>>, vector<8x1024xf32>
    %c0_1 = arith.constant 0 : index
    %c0_2 = arith.constant 0 : index
    %1 = vector.load %arg2[%c0_1, %c0_2] : memref<1024x128xf32, #tpu.memory_space<vmem>>, vector<1024x128xf32>
    %cst = arith.constant dense<0.000000e+00> : vector<8x128xf32>
    %2 = tpu.matmul %0, %1, %cst {dimension_numbers = #tpu.dot_dimension_numbers<[1], [0], [0], [1], [0, 0, 1, 1], [], []>} : vector<8x1024xf32>, vector<1024x128xf32>, vector<8x128xf32> -> vector<8x128xf32>
    %c0_3 = arith.constant 0 : index
    %c0_4 = arith.constant 0 : index
    %3 = vector.load %arg3[%c0_3, %c0_4] : memref<1x128xf32, #tpu.memory_space<vmem>>, vector<1x128xf32>
    %4 = vector.broadcast %3 : vector<1x128xf32> to vector<8x128xf32>
    %5 = arith.addf %2, %4 : vector<8x128xf32>
    %c0_5 = arith.constant 0 : index
    %c0_6 = arith.constant 0 : index
    %6 = vector.load %arg4[%c0_5, %c0_6] : memref<128x128xf32, #tpu.memory_space<vmem>>, vector<128x128xf32>
    %cst_7 = arith.constant dense<0.000000e+00> : vector<8x128xf32>
    %7 = tpu.matmul %5, %6, %cst_7 {dimension_numbers = #tpu.dot_dimension_numbers<[1], [0], [0], [1], [0, 0, 1, 1], [], []>} : vector<8x128xf32>, vector<128x128xf32>, vector<8x128xf32> -> vector<8x128xf32>
    %8 = arith.mulf %5, %5 : vector<8x128xf32>
    %c0_8 = arith.constant 0 : index
    %c0_9 = arith.constant 0 : index
    %9 = vector.load %arg5[%c0_8, %c0_9] : memref<128x128xf32, #tpu.memory_space<vmem>>, vector<128x128xf32>
    %cst_10 = arith.constant dense<0.000000e+00> : vector<8x128xf32>
    %10 = tpu.matmul %8, %9, %cst_10 {dimension_numbers = #tpu.dot_dimension_numbers<[1], [0], [0], [1], [0, 0, 1, 1], [], []>} : vector<8x128xf32>, vector<128x128xf32>, vector<8x128xf32> -> vector<8x128xf32>
    %c0_11 = arith.constant 0 : index
    %c0_12 = arith.constant 0 : index
    %11 = vector.load %arg6[%c0_11, %c0_12] : memref<1x128xf32, #tpu.memory_space<vmem>>, vector<1x128xf32>
    %12 = vector.broadcast %11 : vector<1x128xf32> to vector<8x128xf32>
    %13 = arith.addf %10, %12 : vector<8x128xf32>
    %cst_13 = arith.constant 2.000000e+00 : f32
    %14 = vector.broadcast %cst_13 : f32 to vector<8x128xf32>
    %15 = arith.mulf %14, %7 : vector<8x128xf32>
    %16 = arith.subf %13, %15 : vector<8x128xf32>
    %17 = tpu.iota {dimensions = array<i32: 1>} : vector<8x128xi32>
    %c16_i32 = arith.constant 16 : i32
    %18 = vector.broadcast %c16_i32 : i32 to vector<8x128xi32>
    %19 = arith.cmpi slt, %17, %18 : vector<8x128xi32>
    %c16_i32_14 = arith.constant 16 : i32
    %20 = vector.broadcast %c16_i32_14 : i32 to vector<8x128xi32>
    %21 = arith.cmpi sge, %17, %20 : vector<8x128xi32>
    %c20_i32 = arith.constant 20 : i32
    %22 = vector.broadcast %c20_i32 : i32 to vector<8x128xi32>
    %23 = arith.cmpi slt, %17, %22 : vector<8x128xi32>
    %24 = arith.andi %21, %23 : vector<8x128xi1>
    %c20_i32_15 = arith.constant 20 : i32
    %25 = vector.broadcast %c20_i32_15 : i32 to vector<8x128xi32>
    %26 = arith.cmpi sge, %17, %25 : vector<8x128xi32>
    %c26_i32 = arith.constant 26 : i32
    %27 = vector.broadcast %c26_i32 : i32 to vector<8x128xi32>
    %28 = arith.cmpi slt, %17, %27 : vector<8x128xi32>
    %29 = arith.andi %26, %28 : vector<8x128xi1>
    %c26_i32_16 = arith.constant 26 : i32
    %30 = vector.broadcast %c26_i32_16 : i32 to vector<8x128xi32>
    %31 = arith.cmpi sge, %17, %30 : vector<8x128xi32>
    %c31_i32 = arith.constant 31 : i32
    %32 = vector.broadcast %c31_i32 : i32 to vector<8x128xi32>
    %33 = arith.cmpi slt, %17, %32 : vector<8x128xi32>
    %34 = arith.andi %31, %33 : vector<8x128xi1>
    %c0_17 = arith.constant 0 : index
    %c0_18 = arith.constant 0 : index
    %35 = vector.load %arg9[%c0_17, %c0_18] : memref<8x128xf32, #tpu.memory_space<vmem>>, vector<8x128xf32>
    %cst_19 = arith.constant 0.000000e+00 : f32
    %36 = vector.broadcast %cst_19 : f32 to vector<8x128xf32>
    %37 = arith.subf %36, %16 : vector<8x128xf32>
    %cst_20 = arith.constant -1.000000e+30 : f32
    %38 = vector.broadcast %cst_20 : f32 to vector<8x128xf32>
    %39 = arith.select %19, %37, %38 : vector<8x128xi1>, vector<8x128xf32>
    %cst_21 = arith.constant dense<0xFF800000> : vector<8xf32>
    %40 = vector.multi_reduction <maximumf>, %39, %cst_21 [1] : vector<8x128xf32> to vector<8xf32>
    %41 = vector.shape_cast %40 : vector<8xf32> to vector<8x1xf32>
    %42 = vector.broadcast %41 : vector<8x1xf32> to vector<8x128xf32>
    %43 = arith.subf %39, %42 : vector<8x128xf32>
    %44 = math.exp %43 : vector<8x128xf32>
    %cst_22 = arith.constant 0.000000e+00 : f32
    %45 = vector.broadcast %cst_22 : f32 to vector<8x128xf32>
    %46 = arith.select %19, %44, %45 : vector<8x128xi1>, vector<8x128xf32>
    %cst_23 = arith.constant dense<0.000000e+00> : vector<8xf32>
    %47 = vector.multi_reduction <add>, %46, %cst_23 [1] : vector<8x128xf32> to vector<8xf32>
    %48 = vector.shape_cast %47 : vector<8xf32> to vector<8x1xf32>
    %49 = math.log %48 : vector<8x1xf32>
    %50 = arith.addf %41, %49 : vector<8x1xf32>
    %51 = arith.mulf %35, %37 : vector<8x128xf32>
    %cst_24 = arith.constant 0.000000e+00 : f32
    %52 = vector.broadcast %cst_24 : f32 to vector<8x128xf32>
    %53 = arith.select %19, %51, %52 : vector<8x128xi1>, vector<8x128xf32>
    %cst_25 = arith.constant dense<0.000000e+00> : vector<8xf32>
    %54 = vector.multi_reduction <add>, %53, %cst_25 [1] : vector<8x128xf32> to vector<8xf32>
    %55 = vector.shape_cast %54 : vector<8xf32> to vector<8x1xf32>
    %56 = arith.subf %50, %55 : vector<8x1xf32>
    %57 = vector.extract_strided_slice %10 {offsets = [0, 0], sizes = [8, 1], strides = [1, 1]} : vector<8x128xf32> to vector<8x1xf32>
    %c0_26 = arith.constant 0 : index
    %c0_27 = arith.constant 0 : index
    %58 = vector.load %arg7[%c0_26, %c0_27] : memref<128x8xf32, #tpu.memory_space<vmem>>, vector<128x8xf32>
    %cst_28 = arith.constant dense<0.000000e+00> : vector<8x8xf32>
    %59 = tpu.matmul %5, %58, %cst_28 {dimension_numbers = #tpu.dot_dimension_numbers<[1], [0], [0], [1], [0, 0, 1, 1], [], []>} : vector<8x128xf32>, vector<128x8xf32>, vector<8x8xf32> -> vector<8x8xf32>
    %c0_29 = arith.constant 0 : index
    %c0_30 = arith.constant 0 : index
    %60 = vector.load %arg8[%c0_29, %c0_30] : memref<1x8xf32, #tpu.memory_space<vmem>>, vector<1x8xf32>
    %61 = vector.broadcast %57 : vector<8x1xf32> to vector<8x8xf32>
    %62 = vector.broadcast %60 : vector<1x8xf32> to vector<8x8xf32>
    %63 = arith.addf %61, %62 : vector<8x8xf32>
    %cst_31 = arith.constant 2.000000e+00 : f32
    %64 = vector.broadcast %cst_31 : f32 to vector<8x8xf32>
    %65 = arith.mulf %64, %59 : vector<8x8xf32>
    %66 = arith.subf %63, %65 : vector<8x8xf32>
    %cst_32 = arith.constant 0.000000e+00 : f32
    %67 = vector.broadcast %cst_32 : f32 to vector<8x8xf32>
    %68 = arith.subf %67, %66 : vector<8x8xf32>
    %cst_33 = arith.constant dense<0xFF800000> : vector<8xf32>
    %69 = vector.multi_reduction <maximumf>, %68, %cst_33 [1] : vector<8x8xf32> to vector<8xf32>
    %70 = vector.shape_cast %69 : vector<8xf32> to vector<8x1xf32>
    %71 = vector.broadcast %70 : vector<8x1xf32> to vector<8x8xf32>
    %72 = arith.subf %68, %71 : vector<8x8xf32>
    %73 = math.exp %72 : vector<8x8xf32>
    %cst_34 = arith.constant dense<0.000000e+00> : vector<8xf32>
    %74 = vector.multi_reduction <add>, %73, %cst_34 [1] : vector<8x8xf32> to vector<8xf32>
    %75 = vector.shape_cast %74 : vector<8xf32> to vector<8x1xf32>
    %76 = math.log %75 : vector<8x1xf32>
    %77 = arith.addf %70, %76 : vector<8x1xf32>
    %c0_35 = arith.constant 0 : index
    %c0_36 = arith.constant 0 : index
    %78 = vector.load %arg10[%c0_35, %c0_36] : memref<8x8xf32, #tpu.memory_space<vmem>>, vector<8x8xf32>
    %79 = arith.mulf %78, %68 : vector<8x8xf32>
    %cst_37 = arith.constant dense<0.000000e+00> : vector<8xf32>
    %80 = vector.multi_reduction <add>, %79, %cst_37 [1] : vector<8x8xf32> to vector<8xf32>
    %81 = vector.shape_cast %80 : vector<8xf32> to vector<8x1xf32>
    %82 = arith.subf %77, %81 : vector<8x1xf32>
    %cst_38 = arith.constant 0.000000e+00 : f32
    %83 = vector.broadcast %cst_38 : f32 to vector<8x1xf32>
    %cst_39 = arith.constant -1.000000e+30 : f32
    %84 = vector.broadcast %cst_39 : f32 to vector<8x128xf32>
    %85 = arith.select %24, %16, %84 : vector<8x128xi1>, vector<8x128xf32>
    %cst_40 = arith.constant dense<0xFF800000> : vector<8xf32>
    %86 = vector.multi_reduction <maximumf>, %85, %cst_40 [1] : vector<8x128xf32> to vector<8xf32>
    %87 = vector.shape_cast %86 : vector<8xf32> to vector<8x1xf32>
    %88 = vector.broadcast %87 : vector<8x1xf32> to vector<8x128xf32>
    %89 = arith.subf %85, %88 : vector<8x128xf32>
    %90 = math.exp %89 : vector<8x128xf32>
    %cst_41 = arith.constant 0.000000e+00 : f32
    %91 = vector.broadcast %cst_41 : f32 to vector<8x128xf32>
    %92 = arith.select %24, %90, %91 : vector<8x128xi1>, vector<8x128xf32>
    %cst_42 = arith.constant dense<0.000000e+00> : vector<8xf32>
    %93 = vector.multi_reduction <add>, %92, %cst_42 [1] : vector<8x128xf32> to vector<8xf32>
    %94 = vector.shape_cast %93 : vector<8xf32> to vector<8x1xf32>
    %95 = math.log %94 : vector<8x1xf32>
    %96 = arith.addf %87, %95 : vector<8x1xf32>
    %97 = arith.mulf %35, %16 : vector<8x128xf32>
    %cst_43 = arith.constant 0.000000e+00 : f32
    %98 = vector.broadcast %cst_43 : f32 to vector<8x128xf32>
    %99 = arith.select %24, %97, %98 : vector<8x128xi1>, vector<8x128xf32>
    %cst_44 = arith.constant dense<0.000000e+00> : vector<8xf32>
    %100 = vector.multi_reduction <add>, %99, %cst_44 [1] : vector<8x128xf32> to vector<8xf32>
    %101 = vector.shape_cast %100 : vector<8xf32> to vector<8x1xf32>
    %102 = arith.subf %96, %101 : vector<8x1xf32>
    %c0_45 = arith.constant 0 : index
    %c0_46 = arith.constant 0 : index
    %c0_47 = arith.constant 0 : index
    %103 = vector.load %arg11[%c0_45, %c0_46, %c0_47] : memref<3x8x1xf32, #tpu.memory_space<vmem>>, vector<1x8x1xf32>
    %104 = vector.shape_cast %103 : vector<1x8x1xf32> to vector<8x1xf32>
    %105 = arith.mulf %104, %102 : vector<8x1xf32>
    %106 = arith.addf %83, %105 : vector<8x1xf32>
    %cst_48 = arith.constant -1.000000e+30 : f32
    %107 = vector.broadcast %cst_48 : f32 to vector<8x128xf32>
    %108 = arith.select %29, %16, %107 : vector<8x128xi1>, vector<8x128xf32>
    %cst_49 = arith.constant dense<0xFF800000> : vector<8xf32>
    %109 = vector.multi_reduction <maximumf>, %108, %cst_49 [1] : vector<8x128xf32> to vector<8xf32>
    %110 = vector.shape_cast %109 : vector<8xf32> to vector<8x1xf32>
    %111 = vector.broadcast %110 : vector<8x1xf32> to vector<8x128xf32>
    %112 = arith.subf %108, %111 : vector<8x128xf32>
    %113 = math.exp %112 : vector<8x128xf32>
    %cst_50 = arith.constant 0.000000e+00 : f32
    %114 = vector.broadcast %cst_50 : f32 to vector<8x128xf32>
    %115 = arith.select %29, %113, %114 : vector<8x128xi1>, vector<8x128xf32>
    %cst_51 = arith.constant dense<0.000000e+00> : vector<8xf32>
    %116 = vector.multi_reduction <add>, %115, %cst_51 [1] : vector<8x128xf32> to vector<8xf32>
    %117 = vector.shape_cast %116 : vector<8xf32> to vector<8x1xf32>
    %118 = math.log %117 : vector<8x1xf32>
    %119 = arith.addf %110, %118 : vector<8x1xf32>
    %120 = arith.mulf %35, %16 : vector<8x128xf32>
    %cst_52 = arith.constant 0.000000e+00 : f32
    %121 = vector.broadcast %cst_52 : f32 to vector<8x128xf32>
    %122 = arith.select %29, %120, %121 : vector<8x128xi1>, vector<8x128xf32>
    %cst_53 = arith.constant dense<0.000000e+00> : vector<8xf32>
    %123 = vector.multi_reduction <add>, %122, %cst_53 [1] : vector<8x128xf32> to vector<8xf32>
    %124 = vector.shape_cast %123 : vector<8xf32> to vector<8x1xf32>
    %125 = arith.subf %119, %124 : vector<8x1xf32>
    %c1 = arith.constant 1 : index
    %c0_54 = arith.constant 0 : index
    %c0_55 = arith.constant 0 : index
    %126 = vector.load %arg11[%c1, %c0_54, %c0_55] : memref<3x8x1xf32, #tpu.memory_space<vmem>>, vector<1x8x1xf32>
    %127 = vector.shape_cast %126 : vector<1x8x1xf32> to vector<8x1xf32>
    %128 = arith.mulf %127, %125 : vector<8x1xf32>
    %129 = arith.addf %106, %128 : vector<8x1xf32>
    %cst_56 = arith.constant -1.000000e+30 : f32
    %130 = vector.broadcast %cst_56 : f32 to vector<8x128xf32>
    %131 = arith.select %34, %16, %130 : vector<8x128xi1>, vector<8x128xf32>
    %cst_57 = arith.constant dense<0xFF800000> : vector<8xf32>
    %132 = vector.multi_reduction <maximumf>, %131, %cst_57 [1] : vector<8x128xf32> to vector<8xf32>
    %133 = vector.shape_cast %132 : vector<8xf32> to vector<8x1xf32>
    %134 = vector.broadcast %133 : vector<8x1xf32> to vector<8x128xf32>
    %135 = arith.subf %131, %134 : vector<8x128xf32>
    %136 = math.exp %135 : vector<8x128xf32>
    %cst_58 = arith.constant 0.000000e+00 : f32
    %137 = vector.broadcast %cst_58 : f32 to vector<8x128xf32>
    %138 = arith.select %34, %136, %137 : vector<8x128xi1>, vector<8x128xf32>
    %cst_59 = arith.constant dense<0.000000e+00> : vector<8xf32>
    %139 = vector.multi_reduction <add>, %138, %cst_59 [1] : vector<8x128xf32> to vector<8xf32>
    %140 = vector.shape_cast %139 : vector<8xf32> to vector<8x1xf32>
    %141 = math.log %140 : vector<8x1xf32>
    %142 = arith.addf %133, %141 : vector<8x1xf32>
    %143 = arith.mulf %35, %16 : vector<8x128xf32>
    %cst_60 = arith.constant 0.000000e+00 : f32
    %144 = vector.broadcast %cst_60 : f32 to vector<8x128xf32>
    %145 = arith.select %34, %143, %144 : vector<8x128xi1>, vector<8x128xf32>
    %cst_61 = arith.constant dense<0.000000e+00> : vector<8xf32>
    %146 = vector.multi_reduction <add>, %145, %cst_61 [1] : vector<8x128xf32> to vector<8xf32>
    %147 = vector.shape_cast %146 : vector<8xf32> to vector<8x1xf32>
    %148 = arith.subf %142, %147 : vector<8x1xf32>
    %c2 = arith.constant 2 : index
    %c0_62 = arith.constant 0 : index
    %c0_63 = arith.constant 0 : index
    %149 = vector.load %arg11[%c2, %c0_62, %c0_63] : memref<3x8x1xf32, #tpu.memory_space<vmem>>, vector<1x8x1xf32>
    %150 = vector.shape_cast %149 : vector<1x8x1xf32> to vector<8x1xf32>
    %151 = arith.mulf %150, %148 : vector<8x1xf32>
    %152 = arith.addf %129, %151 : vector<8x1xf32>
    %153 = math.sqrt %57 : vector<8x1xf32>
    %c0_i32 = arith.constant 0 : i32
    %154 = vector.broadcast %c0_i32 : i32 to vector<8x128xi32>
    %155 = arith.cmpi eq, %17, %154 : vector<8x128xi32>
    %cst_64 = arith.constant 0.000000e+00 : f32
    %156 = vector.shape_cast %56 : vector<8x1xf32> to vector<8x1xf32>
    %157 = vector.broadcast %156 : vector<8x1xf32> to vector<8x128xf32>
    %158 = vector.broadcast %cst_64 : f32 to vector<8x128xf32>
    %159 = arith.select %155, %157, %158 : vector<8x128xi1>, vector<8x128xf32>
    %c1_i32 = arith.constant 1 : i32
    %160 = vector.broadcast %c1_i32 : i32 to vector<8x128xi32>
    %161 = arith.cmpi eq, %17, %160 : vector<8x128xi32>
    %cst_65 = arith.constant 0.000000e+00 : f32
    %162 = vector.shape_cast %82 : vector<8x1xf32> to vector<8x1xf32>
    %163 = vector.broadcast %162 : vector<8x1xf32> to vector<8x128xf32>
    %164 = vector.broadcast %cst_65 : f32 to vector<8x128xf32>
    %165 = arith.select %161, %163, %164 : vector<8x128xi1>, vector<8x128xf32>
    %166 = arith.addf %159, %165 : vector<8x128xf32>
    %c2_i32 = arith.constant 2 : i32
    %167 = vector.broadcast %c2_i32 : i32 to vector<8x128xi32>
    %168 = arith.cmpi eq, %17, %167 : vector<8x128xi32>
    %cst_66 = arith.constant 0.000000e+00 : f32
    %169 = vector.shape_cast %152 : vector<8x1xf32> to vector<8x1xf32>
    %170 = vector.broadcast %169 : vector<8x1xf32> to vector<8x128xf32>
    %171 = vector.broadcast %cst_66 : f32 to vector<8x128xf32>
    %172 = arith.select %168, %170, %171 : vector<8x128xi1>, vector<8x128xf32>
    %173 = arith.addf %166, %172 : vector<8x128xf32>
    %c3_i32 = arith.constant 3 : i32
    %174 = vector.broadcast %c3_i32 : i32 to vector<8x128xi32>
    %175 = arith.cmpi eq, %17, %174 : vector<8x128xi32>
    %cst_67 = arith.constant 0.000000e+00 : f32
    %176 = vector.shape_cast %153 : vector<8x1xf32> to vector<8x1xf32>
    %177 = vector.broadcast %176 : vector<8x1xf32> to vector<8x128xf32>
    %178 = vector.broadcast %cst_67 : f32 to vector<8x128xf32>
    %179 = arith.select %175, %177, %178 : vector<8x128xi1>, vector<8x128xf32>
    %180 = arith.addf %173, %179 : vector<8x128xf32>
    %cst_68 = arith.constant 1.250000e-01 : f32
    %181 = vector.broadcast %cst_68 : f32 to vector<1x8xf32>
    %cst_69 = arith.constant dense<0.000000e+00> : vector<1x128xf32>
    %182 = tpu.matmul %181, %180, %cst_69 {dimension_numbers = #tpu.dot_dimension_numbers<[1], [0], [0], [1], [0, 0, 1, 1], [], []>} : vector<1x8xf32>, vector<8x128xf32>, vector<1x128xf32> -> vector<1x128xf32>
    %c0_70 = arith.constant 0 : index
    %c0_71 = arith.constant 0 : index
    %183 = vector.load %arg12[%c0_70, %c0_71] : memref<1x128xf32, #tpu.memory_space<vmem>>, vector<1x128xf32>
    tpu.vector_store %arg12[%c0_70, %c0_71], %182 {strides = array<i32>} : memref<1x128xf32, #tpu.memory_space<vmem>>, vector<1x128xf32>,
    return
  }
  func.func @transform_0(%arg0: i32) -> (i32, i32) {
    %c0_i32 = arith.constant 0 : i32
    %c0_i32_0 = arith.constant 0 : i32
    %c0_i32_1 = arith.constant 0 : i32
    return %c0_i32, %c0_i32_0 : i32, i32
  }
  func.func @transform_1(%arg0: i32) -> (i32, i32) {
    %c0_i32 = arith.constant 0 : i32
    %c0_i32_0 = arith.constant 0 : i32
    %c0_i32_1 = arith.constant 0 : i32
    return %c0_i32, %c0_i32_0 : i32, i32
  }
  func.func @transform_2(%arg0: i32) -> (i32, i32) {
    %c0_i32 = arith.constant 0 : i32
    %c0_i32_0 = arith.constant 0 : i32
    %c0_i32_1 = arith.constant 0 : i32
    return %c0_i32, %c0_i32_0 : i32, i32
  }
  func.func @transform_3(%arg0: i32) -> (i32, i32) {
    %c0_i32 = arith.constant 0 : i32
    %c0_i32_0 = arith.constant 0 : i32
    %c0_i32_1 = arith.constant 0 : i32
    return %c0_i32, %c0_i32_0 : i32, i32
  }
  func.func @transform_4(%arg0: i32) -> (i32, i32) {
    %c0_i32 = arith.constant 0 : i32
    %c0_i32_0 = arith.constant 0 : i32
    %c0_i32_1 = arith.constant 0 : i32
    return %c0_i32, %c0_i32_0 : i32, i32
  }
  func.func @transform_5(%arg0: i32) -> (i32, i32) {
    %c0_i32 = arith.constant 0 : i32
    %c0_i32_0 = arith.constant 0 : i32
    %c0_i32_1 = arith.constant 0 : i32
    return %c0_i32, %c0_i32_0 : i32, i32
  }
  func.func @transform_6(%arg0: i32) -> (i32, i32) {
    %c0_i32 = arith.constant 0 : i32
    %c0_i32_0 = arith.constant 0 : i32
    %c0_i32_1 = arith.constant 0 : i32
    return %c0_i32, %c0_i32_0 : i32, i32
  }
  func.func @transform_7(%arg0: i32) -> (i32, i32) {
    %c0_i32 = arith.constant 0 : i32
    %c0_i32_0 = arith.constant 0 : i32
    %c0_i32_1 = arith.constant 0 : i32
    return %c0_i32, %c0_i32_0 : i32, i32
  }
  func.func @transform_8(%arg0: i32) -> (i32, i32) {
    %c0_i32 = arith.constant 0 : i32
    %c0_i32_0 = arith.constant 0 : i32
    %c0_i32_1 = arith.constant 0 : i32
    return %c0_i32, %c0_i32_0 : i32, i32
  }
  func.func @transform_9(%arg0: i32) -> (i32, i32) {
    %c0_i32 = arith.constant 0 : i32
    %c0_i32_0 = arith.constant 0 : i32
    %c0_i32_1 = arith.constant 0 : i32
    return %c0_i32, %c0_i32_0 : i32, i32
  }
  func.func @transform_10(%arg0: i32) -> (i32, i32, i32) {
    %c0_i32 = arith.constant 0 : i32
    %c0_i32_0 = arith.constant 0 : i32
    %c0_i32_1 = arith.constant 0 : i32
    %c0_i32_2 = arith.constant 0 : i32
    return %c0_i32, %c0_i32_0, %c0_i32_1 : i32, i32, i32
  }
  func.func @transform_11(%arg0: i32) -> (i32, i32) {
    %c0_i32 = arith.constant 0 : i32
    %c0_i32_0 = arith.constant 0 : i32
    %c0_i32_1 = arith.constant 0 : i32
    return %c0_i32, %c0_i32_0 : i32, i32
  }
}

</mosaic_0001>

<llo_original>
// kernel: coop_proxy_loss_forward.1
$region0: #{coop_proxy_loss_forward.1}
  #allocation0 [shape = 'u32[]', space=smem, size = 0x4, offset = 0x4, fixed_abs, tag = 'smem constant byte address 0x4 - core index']
  #allocation1 [shape = 'u32[72,128]{1,0:T(1,128)}', space=vmem, size = 0x9000, scoped, tag = 'internal scratch']
  %s0 = inlined_call_operand.vmem [shape: f32[8,1024], index: 0, kind: input, shape index: {}]
  %s1 = inlined_call_operand.vmem [shape: f32[1024,128], index: 1, kind: input, shape index: {}]
  %s2 = inlined_call_operand.vmem [shape: f32[1,128], index: 2, kind: input, shape index: {}]
  %s3 = inlined_call_operand.vmem [shape: f32[128,128], index: 3, kind: input, shape index: {}]
  %s4 = inlined_call_operand.vmem [shape: f32[128,128], index: 4, kind: input, shape index: {}]
  %s5 = inlined_call_operand.vmem [shape: f32[1,128], index: 5, kind: input, shape index: {}]
  %s6 = inlined_call_operand.vmem [shape: f32[128,8], index: 6, kind: input, shape index: {}]
  %s7 = inlined_call_operand.vmem [shape: f32[1,8], index: 7, kind: input, shape index: {}]
  %s8 = inlined_call_operand.vmem [shape: f32[8,128], index: 8, kind: input, shape index: {}]
  %s9 = inlined_call_operand.vmem [shape: f32[8,8], index: 9, kind: input, shape index: {}]
  %s10 = inlined_call_operand.vmem [shape: f32[3,8,1], index: 10, kind: input, shape index: {}]
  %s11 = inlined_call_operand.vmem [shape: f32[1,128], index: 11, kind: output, shape index: {}]
  %s12 = sld [smem:[#allocation0]]
  $region54: #{coop_proxy_loss_forward.1} parent=0
    _
  %s14 = ssub.s32 1, %s12
  %s15 = scalar_select 0, %s14, %s12
  // Predicated region
  $region2: #{coop_proxy_loss_forward.1} parent=0 // pred_check
    _
  $region3: #{coop_proxy_loss_forward.1} parent=0 // pred_check_branch
    %17 = sbr.rel (0) target = $region5
  $region4: #{coop_proxy_loss_forward.1} parent=0 // pred_region
    _
  $region5: #{coop_proxy_loss_forward.1} parent=0 // pred_fallthru
    _
  // Predicated region
  $region6: #{coop_proxy_loss_forward.1} parent=0 // pred_check
    _
  $region7: #{coop_proxy_loss_forward.1} parent=0 // pred_check_branch
    %19 = sbr.rel (0) target = $region9
  $region8: #{coop_proxy_loss_forward.1} parent=0 // pred_region
    _
  $region9: #{coop_proxy_loss_forward.1} parent=0 // pred_fallthru
    _
  // Predicated region
  $region10: #{coop_proxy_loss_forward.1} parent=0 // pred_check
    _
  $region11: #{coop_proxy_loss_forward.1} parent=0 // pred_check_branch
    %21 = sbr.rel (0) target = $region13
  $region12: #{coop_proxy_loss_forward.1} parent=0 // pred_region
    _
  $region13: #{coop_proxy_loss_forward.1} parent=0 // pred_fallthru
    _
  // Predicated region
  $region14: #{coop_proxy_loss_forward.1} parent=0 // pred_check
    _
  $region15: #{coop_proxy_loss_forward.1} parent=0 // pred_check_branch
    %23 = sbr.rel (0) target = $region17
  $region16: #{coop_proxy_loss_forward.1} parent=0 // pred_region
    _
  $region17: #{coop_proxy_loss_forward.1} parent=0 // pred_fallthru
    _
  // Predicated region
  $region18: #{coop_proxy_loss_forward.1} parent=0 // pred_check
    _
  $region19: #{coop_proxy_loss_forward.1} parent=0 // pred_check_branch
    %25 = sbr.rel (0) target = $region21
  $region20: #{coop_proxy_loss_forward.1} parent=0 // pred_region
    _
  $region21: #{coop_proxy_loss_forward.1} parent=0 // pred_fallthru
    _
  // Predicated region
  $region22: #{coop_proxy_loss_forward.1} parent=0 // pred_check
    _
  $region23: #{coop_proxy_loss_forward.1} parent=0 // pred_check_branch
    %27 = sbr.rel (0) target = $region25
  $region24: #{coop_proxy_loss_forward.1} parent=0 // pred_region
    _
  $region25: #{coop_proxy_loss_forward.1} parent=0 // pred_fallthru
    _
  // Predicated region
  $region26: #{coop_proxy_loss_forward.1} parent=0 // pred_check
    _
  $region27: #{coop_proxy_loss_forward.1} parent=0 // pred_check_branch
    %29 = sbr.rel (0) target = $region29
  $region28: #{coop_proxy_loss_forward.1} parent=0 // pred_region
    _
  $region29: #{coop_proxy_loss_forward.1} parent=0 // pred_fallthru
    _
  // Predicated region
  $region30: #{coop_proxy_loss_forward.1} parent=0 // pred_check
    _
  $region31: #{coop_proxy_loss_forward.1} parent=0 // pred_check_branch
    %31 = sbr.rel (0) target = $region33
  $region32: #{coop_proxy_loss_forward.1} parent=0 // pred_region
    _
  $region33: #{coop_proxy_loss_forward.1} parent=0 // pred_fallthru
    _
  // Predicated region
  $region34: #{coop_proxy_loss_forward.1} parent=0 // pred_check
    _
  $region35: #{coop_proxy_loss_forward.1} parent=0 // pred_check_branch
    %33 = sbr.rel (0) target = $region37
  $region36: #{coop_proxy_loss_forward.1} parent=0 // pred_region
    _
  $region37: #{coop_proxy_loss_forward.1} parent=0 // pred_fallthru
    _
  // Predicated region
  $region38: #{coop_proxy_loss_forward.1} parent=0 // pred_check
    _
  $region39: #{coop_proxy_loss_forward.1} parent=0 // pred_check_branch
    %35 = sbr.rel (0) target = $region41
  $region40: #{coop_proxy_loss_forward.1} parent=0 // pred_region
    _
  $region41: #{coop_proxy_loss_forward.1} parent=0 // pred_fallthru
    _
  // Predicated region
  $region42: #{coop_proxy_loss_forward.1} parent=0 // pred_check
    _
  $region43: #{coop_proxy_loss_forward.1} parent=0 // pred_check_branch
    %37 = sbr.rel (0) target = $region45
  $region44: #{coop_proxy_loss_forward.1} parent=0 // pred_region
    _
  $region45: #{coop_proxy_loss_forward.1} parent=0 // pred_fallthru
    _
  %v38 = vld [vmem:[%s0] sm:$0xff]
  %v39 = vld [vmem:[%s0 + $0x8] sm:$0xff]
  %v40 = vld [vmem:[%s0 + $0x10] sm:$0xff]
  %v41 = vld [vmem:[%s0 + $0x18] sm:$0xff]
  %v42 = vld [vmem:[%s0 + $0x20] sm:$0xff]
  %v43 = vld [vmem:[%s0 + $0x28] sm:$0xff]
  %v44 = vld [vmem:[%s0 + $0x30] sm:$0xff]
  %v45 = vld [vmem:[%s0 + $0x38] sm:$0xff]
  %v46 = vld [vmem:[%s1] sm:$0xff]
  %v47 = vld [vmem:[%s1 + $0x8] sm:$0xff]
  %v48 = vld [vmem:[%s1 + $0x10] sm:$0xff]
  %v49 = vld [vmem:[%s1 + $0x18] sm:$0xff]
  %v50 = vld [vmem:[%s1 + $0x20] sm:$0xff]
  %v51 = vld [vmem:[%s1 + $0x28] sm:$0xff]
  %v52 = vld [vmem:[%s1 + $0x30] sm:$0xff]
  %v53 = vld [vmem:[%s1 + $0x38] sm:$0xff]
  %v54 = vld [vmem:[%s1 + $0x40] sm:$0xff]
  %v55 = vld [vmem:[%s1 + $0x48] sm:$0xff]
  %v56 = vld [vmem:[%s1 + $0x50] sm:$0xff]
  %v57 = vld [vmem:[%s1 + $0x58] sm:$0xff]
  %v58 = vld [vmem:[%s1 + $0x60] sm:$0xff]
  %v59 = vld [vmem:[%s1 + $0x68] sm:$0xff]
  %v60 = vld [vmem:[%s1 + $0x70] sm:$0xff]
  %v61 = vld [vmem:[%s1 + $0x78] sm:$0xff]
  %v62 = vld [vmem:[%s1 + $0x80] sm:$0xff]
  %v63 = vld [vmem:[%s1 + $0x88] sm:$0xff]
  %v64 = vld [vmem:[%s1 + $0x90] sm:$0xff]
  %v65 = vld [vmem:[%s1 + $0x98] sm:$0xff]
  %v66 = vld [vmem:[%s1 + $0xa0] sm:$0xff]
  %v67 = vld [vmem:[%s1 + $0xa8] sm:$0xff]
  %v68 = vld [vmem:[%s1 + $0xb0] sm:$0xff]
  %v69 = vld [vmem:[%s1 + $0xb8] sm:$0xff]
  %v70 = vld [vmem:[%s1 + $0xc0] sm:$0xff]
  %v71 = vld [vmem:[%s1 + $0xc8] sm:$0xff]
  %v72 = vld [vmem:[%s1 + $0xd0] sm:$0xff]
  %v73 = vld [vmem:[%s1 + $0xd8] sm:$0xff]
  %v74 = vld [vmem:[%s1 + $0xe0] sm:$0xff]
  %v75 = vld [vmem:[%s1 + $0xe8] sm:$0xff]
  %v76 = vld [vmem:[%s1 + $0xf0] sm:$0xff]
  %v77 = vld [vmem:[%s1 + $0xf8] sm:$0xff]
  %v78 = vld [vmem:[%s1 + $0x100] sm:$0xff]
  %v79 = vld [vmem:[%s1 + $0x108] sm:$0xff]
  %v80 = vld [vmem:[%s1 + $0x110] sm:$0xff]
  %v81 = vld [vmem:[%s1 + $0x118] sm:$0xff]
  %v82 = vld [vmem:[%s1 + $0x120] sm:$0xff]
  %v83 = vld [vmem:[%s1 + $0x128] sm:$0xff]
  %v84 = vld [vmem:[%s1 + $0x130] sm:$0xff]
  %v85 = vld [vmem:[%s1 + $0x138] sm:$0xff]
  %v86 = vld [vmem:[%s1 + $0x140] sm:$0xff]
  %v87 = vld [vmem:[%s1 + $0x148] sm:$0xff]
  %v88 = vld [vmem:[%s1 + $0x150] sm:$0xff]
  %v89 = vld [vmem:[%s1 + $0x158] sm:$0xff]
  %v90 = vld [vmem:[%s1 + $0x160] sm:$0xff]
  %v91 = vld [vmem:[%s1 + $0x168] sm:$0xff]
  %v92 = vld [vmem:[%s1 + $0x170] sm:$0xff]
  %v93 = vld [vmem:[%s1 + $0x178] sm:$0xff]
  %v94 = vld [vmem:[%s1 + $0x180] sm:$0xff]
  %v95 = vld [vmem:[%s1 + $0x188] sm:$0xff]
  %v96 = vld [vmem:[%s1 + $0x190] sm:$0xff]
  %v97 = vld [vmem:[%s1 + $0x198] sm:$0xff]
  %v98 = vld [vmem:[%s1 + $0x1a0] sm:$0xff]
  %v99 = vld [vmem:[%s1 + $0x1a8] sm:$0xff]
  %v100 = vld [vmem:[%s1 + $0x1b0] sm:$0xff]
  %v101 = vld [vmem:[%s1 + $0x1b8] sm:$0xff]
  %v102 = vld [vmem:[%s1 + $0x1c0] sm:$0xff]
  %v103 = vld [vmem:[%s1 + $0x1c8] sm:$0xff]
  %v104 = vld [vmem:[%s1 + $0x1d0] sm:$0xff]
  %v105 = vld [vmem:[%s1 + $0x1d8] sm:$0xff]
  %v106 = vld [vmem:[%s1 + $0x1e0] sm:$0xff]
  %v107 = vld [vmem:[%s1 + $0x1e8] sm:$0xff]
  %v108 = vld [vmem:[%s1 + $0x1f0] sm:$0xff]
  %v109 = vld [vmem:[%s1 + $0x1f8] sm:$0xff]
  %v110 = vld [vmem:[%s1 + $0x200] sm:$0xff]
  %v111 = vld [vmem:[%s1 + $0x208] sm:$0xff]
  %v112 = vld [vmem:[%s1 + $0x210] sm:$0xff]
  %v113 = vld [vmem:[%s1 + $0x218] sm:$0xff]
  %v114 = vld [vmem:[%s1 + $0x220] sm:$0xff]
  %v115 = vld [vmem:[%s1 + $0x228] sm:$0xff]
  %v116 = vld [vmem:[%s1 + $0x230] sm:$0xff]
  %v117 = vld [vmem:[%s1 + $0x238] sm:$0xff]
  %v118 = vld [vmem:[%s1 + $0x240] sm:$0xff]
  %v119 = vld [vmem:[%s1 + $0x248] sm:$0xff]
  %v120 = vld [vmem:[%s1 + $0x250] sm:$0xff]
  %v121 = vld [vmem:[%s1 + $0x258] sm:$0xff]
  %v122 = vld [vmem:[%s1 + $0x260] sm:$0xff]
  %v123 = vld [vmem:[%s1 + $0x268] sm:$0xff]
  %v124 = vld [vmem:[%s1 + $0x270] sm:$0xff]
  %v125 = vld [vmem:[%s1 + $0x278] sm:$0xff]
  %v126 = vld [vmem:[%s1 + $0x280] sm:$0xff]
  %v127 = vld [vmem:[%s1 + $0x288] sm:$0xff]
  %v128 = vld [vmem:[%s1 + $0x290] sm:$0xff]
  %v129 = vld [vmem:[%s1 + $0x298] sm:$0xff]
  %v130 = vld [vmem:[%s1 + $0x2a0] sm:$0xff]
  %v131 = vld [vmem:[%s1 + $0x2a8] sm:$0xff]
  %v132 = vld [vmem:[%s1 + $0x2b0] sm:$0xff]
  %v133 = vld [vmem:[%s1 + $0x2b8] sm:$0xff]
  %v134 = vld [vmem:[%s1 + $0x2c0] sm:$0xff]
  %v135 = vld [vmem:[%s1 + $0x2c8] sm:$0xff]
  %v136 = vld [vmem:[%s1 + $0x2d0] sm:$0xff]
  %v137 = vld [vmem:[%s1 + $0x2d8] sm:$0xff]
  %v138 = vld [vmem:[%s1 + $0x2e0] sm:$0xff]
  %v139 = vld [vmem:[%s1 + $0x2e8] sm:$0xff]
  %v140 = vld [vmem:[%s1 + $0x2f0] sm:$0xff]
  %v141 = vld [vmem:[%s1 + $0x2f8] sm:$0xff]
  %v142 = vld [vmem:[%s1 + $0x300] sm:$0xff]
  %v143 = vld [vmem:[%s1 + $0x308] sm:$0xff]
  %v144 = vld [vmem:[%s1 + $0x310] sm:$0xff]
  %v145 = vld [vmem:[%s1 + $0x318] sm:$0xff]
  %v146 = vld [vmem:[%s1 + $0x320] sm:$0xff]
  %v147 = vld [vmem:[%s1 + $0x328] sm:$0xff]
  %v148 = vld [vmem:[%s1 + $0x330] sm:$0xff]
  %v149 = vld [vmem:[%s1 + $0x338] sm:$0xff]
  %v150 = vld [vmem:[%s1 + $0x340] sm:$0xff]
  %v151 = vld [vmem:[%s1 + $0x348] sm:$0xff]
  %v152 = vld [vmem:[%s1 + $0x350] sm:$0xff]
  %v153 = vld [vmem:[%s1 + $0x358] sm:$0xff]
  %v154 = vld [vmem:[%s1 + $0x360] sm:$0xff]
  %v155 = vld [vmem:[%s1 + $0x368] sm:$0xff]
  %v156 = vld [vmem:[%s1 + $0x370] sm:$0xff]
  %v157 = vld [vmem:[%s1 + $0x378] sm:$0xff]
  %v158 = vld [vmem:[%s1 + $0x380] sm:$0xff]
  %v159 = vld [vmem:[%s1 + $0x388] sm:$0xff]
  %v160 = vld [vmem:[%s1 + $0x390] sm:$0xff]
  %v161 = vld [vmem:[%s1 + $0x398] sm:$0xff]
  %v162 = vld [vmem:[%s1 + $0x3a0] sm:$0xff]
  %v163 = vld [vmem:[%s1 + $0x3a8] sm:$0xff]
  %v164 = vld [vmem:[%s1 + $0x3b0] sm:$0xff]
  %v165 = vld [vmem:[%s1 + $0x3b8] sm:$0xff]
  %v166 = vld [vmem:[%s1 + $0x3c0] sm:$0xff]
  %v167 = vld [vmem:[%s1 + $0x3c8] sm:$0xff]
  %v168 = vld [vmem:[%s1 + $0x3d0] sm:$0xff]
  %v169 = vld [vmem:[%s1 + $0x3d8] sm:$0xff]
  %v170 = vld [vmem:[%s1 + $0x3e0] sm:$0xff]
  %v171 = vld [vmem:[%s1 + $0x3e8] sm:$0xff]
  %v172 = vld [vmem:[%s1 + $0x3f0] sm:$0xff]
  %v173 = vld [vmem:[%s1 + $0x3f8] sm:$0xff]
  %v174 = vld [vmem:[%s2] sm:$0x1]
  %v176 = vperm.slane %v174, 0
  %178 = vmatpush.msra.mxu0 %v61
  %179 = vmatpush.msra.mxu0 %v60
  %180 = vmatpush.msra.mxu0 %v59
  %181 = vmatpush.msra.mxu0 %v58
  %182 = vmatpush.msra.mxu0 %v57
  %183 = vmatpush.msra.mxu0 %v56
  %184 = vmatpush.msra.mxu0 %v55
  %185 = vmatpush.msra.mxu0 %v54
  %186 = vmatpush.msra.mxu0 %v53
  %187 = vmatpush.msra.mxu0 %v52
  %188 = vmatpush.msra.mxu0 %v51
  %189 = vmatpush.msra.mxu0 %v50
  %190 = vmatpush.msra.mxu0 %v49
  %191 = vmatpush.msra.mxu0 %v48
  %192 = vmatpush.msra.mxu0 %v47
  %193 = vmatpush.msra.mxu0 %v46
  %194 = vmatmul.f32.gmra.mxu0 %v38
  %v195 = vpop.f32.mrf.mxu0
  %v196 = vadd.f32 %v176, %v195
  %197 = vdwg.mxu0
  %198 = vmatpush.msra.mxu0 %v77
  %199 = vmatpush.msra.mxu0 %v76
  %200 = vmatpush.msra.mxu0 %v75
  %201 = vmatpush.msra.mxu0 %v74
  %202 = vmatpush.msra.mxu0 %v73
  %203 = vmatpush.msra.mxu0 %v72
  %204 = vmatpush.msra.mxu0 %v71
  %205 = vmatpush.msra.mxu0 %v70
  %206 = vmatpush.msra.mxu0 %v69
  %207 = vmatpush.msra.mxu0 %v68
  %208 = vmatpush.msra.mxu0 %v67
  %209 = vmatpush.msra.mxu0 %v66
  %210 = vmatpush.msra.mxu0 %v65
  %211 = vmatpush.msra.mxu0 %v64
  %212 = vmatpush.msra.mxu0 %v63
  %213 = vmatpush.msra.mxu0 %v62
  %214 = vmatmul.f32.gmra.mxu0 %v39
  %v215 = vpop.f32.mrf.mxu0
  %v216 = vadd.f32 %v196, %v215
  %217 = vdwg.mxu0
  %218 = vmatpush.msra.mxu0 %v93
  %219 = vmatpush.msra.mxu0 %v92
  %220 = vmatpush.msra.mxu0 %v91
  %221 = vmatpush.msra.mxu0 %v90
  %222 = vmatpush.msra.mxu0 %v89
  %223 = vmatpush.msra.mxu0 %v88
  %224 = vmatpush.msra.mxu0 %v87
  %225 = vmatpush.msra.mxu0 %v86
  %226 = vmatpush.msra.mxu0 %v85
  %227 = vmatpush.msra.mxu0 %v84
  %228 = vmatpush.msra.mxu0 %v83
  %229 = vmatpush.msra.mxu0 %v82
  %230 = vmatpush.msra.mxu0 %v81
  %231 = vmatpush.msra.mxu0 %v80
  %232 = vmatpush.msra.mxu0 %v79
  %233 = vmatpush.msra.mxu0 %v78
  %234 = vmatmul.f32.gmra.mxu0 %v40
  %v235 = vpop.f32.mrf.mxu0
  %v236 = vadd.f32 %v216, %v235
  %237 = vdwg.mxu0
  %238 = vmatpush.msra.mxu0 %v109
  %239 = vmatpush.msra.mxu0 %v108
  %240 = vmatpush.msra.mxu0 %v107
  %241 = vmatpush.msra.mxu0 %v106
  %242 = vmatpush.msra.mxu0 %v105
  %243 = vmatpush.msra.mxu0 %v104
  %244 = vmatpush.msra.mxu0 %v103
  %245 = vmatpush.msra.mxu0 %v102
  %246 = vmatpush.msra.mxu0 %v101
  %247 = vmatpush.msra.mxu0 %v100
  %248 = vmatpush.msra.mxu0 %v99
  %249 = vmatpush.msra.mxu0 %v98
  %250 = vmatpush.msra.mxu0 %v97
  %251 = vmatpush.msra.mxu0 %v96
  %252 = vmatpush.msra.mxu0 %v95
  %253 = vmatpush.msra.mxu0 %v94
  %254 = vmatmul.f32.gmra.mxu0 %v41
  %v255 = vpop.f32.mrf.mxu0
  %v256 = vadd.f32 %v236, %v255
  %257 = vdwg.mxu0
  %258 = vmatpush.msra.mxu0 %v125
  %259 = vmatpush.msra.mxu0 %v124
  %260 = vmatpush.msra.mxu0 %v123
  %261 = vmatpush.msra.mxu0 %v122
  %262 = vmatpush.msra.mxu0 %v121
  %263 = vmatpush.msra.mxu0 %v120
  %264 = vmatpush.msra.mxu0 %v119
  %265 = vmatpush.msra.mxu0 %v118
  %266 = vmatpush.msra.mxu0 %v117
  %267 = vmatpush.msra.mxu0 %v116
  %268 = vmatpush.msra.mxu0 %v115
  %269 = vmatpush.msra.mxu0 %v114
  %270 = vmatpush.msra.mxu0 %v113
  %271 = vmatpush.msra.mxu0 %v112
  %272 = vmatpush.msra.mxu0 %v111
  %273 = vmatpush.msra.mxu0 %v110
  %274 = vmatmul.f32.gmra.mxu0 %v42
  %v275 = vpop.f32.mrf.mxu0
  %v276 = vadd.f32 %v256, %v275
  %277 = vdwg.mxu0
  %278 = vmatpush.msra.mxu0 %v141
  %279 = vmatpush.msra.mxu0 %v140
  %280 = vmatpush.msra.mxu0 %v139
  %281 = vmatpush.msra.mxu0 %v138
  %282 = vmatpush.msra.mxu0 %v137
  %283 = vmatpush.msra.mxu0 %v136
  %284 = vmatpush.msra.mxu0 %v135
  %285 = vmatpush.msra.mxu0 %v134
  %286 = vmatpush.msra.mxu0 %v133
  %287 = vmatpush.msra.mxu0 %v132
  %288 = vmatpush.msra.mxu0 %v131
  %289 = vmatpush.msra.mxu0 %v130
  %290 = vmatpush.msra.mxu0 %v129
  %291 = vmatpush.msra.mxu0 %v128
  %292 = vmatpush.msra.mxu0 %v127
  %293 = vmatpush.msra.mxu0 %v126
  %294 = vmatmul.f32.gmra.mxu0 %v43
  %v295 = vpop.f32.mrf.mxu0
  %v296 = vadd.f32 %v276, %v295
  %297 = vdwg.mxu0
  %298 = vmatpush.msra.mxu0 %v157
  %299 = vmatpush.msra.mxu0 %v156
  %300 = vmatpush.msra.mxu0 %v155
  %301 = vmatpush.msra.mxu0 %v154
  %302 = vmatpush.msra.mxu0 %v153
  %303 = vmatpush.msra.mxu0 %v152
  %304 = vmatpush.msra.mxu0 %v151
  %305 = vmatpush.msra.mxu0 %v150
  %306 = vmatpush.msra.mxu0 %v149
  %307 = vmatpush.msra.mxu0 %v148
  %308 = vmatpush.msra.mxu0 %v147
  %309 = vmatpush.msra.mxu0 %v146
  %310 = vmatpush.msra.mxu0 %v145
  %311 = vmatpush.msra.mxu0 %v144
  %312 = vmatpush.msra.mxu0 %v143
  %313 = vmatpush.msra.mxu0 %v142
  %314 = vmatmul.f32.gmra.mxu0 %v44
  %v315 = vpop.f32.mrf.mxu0
  %v316 = vadd.f32 %v296, %v315
  %317 = vdwg.mxu0
  %318 = vmatpush.msra.mxu0 %v173
  %319 = vmatpush.msra.mxu0 %v172
  %320 = vmatpush.msra.mxu0 %v171
  %321 = vmatpush.msra.mxu0 %v170
  %322 = vmatpush.msra.mxu0 %v169
  %323 = vmatpush.msra.mxu0 %v168
  %324 = vmatpush.msra.mxu0 %v167
  %325 = vmatpush.msra.mxu0 %v166
  %326 = vmatpush.msra.mxu0 %v165
  %327 = vmatpush.msra.mxu0 %v164
  %328 = vmatpush.msra.mxu0 %v163
  %329 = vmatpush.msra.mxu0 %v162
  %330 = vmatpush.msra.mxu0 %v161
  %331 = vmatpush.msra.mxu0 %v160
  %332 = vmatpush.msra.mxu0 %v159
  %333 = vmatpush.msra.mxu0 %v158
  %334 = vmatmul.f32.gmra.mxu0 %v45
  %v335 = vpop.f32.mrf.mxu0
  %v336 = vadd.f32 %v316, %v335
  %337 = vdwg.mxu0
  %v338 = vld [vmem:[%s3] sm:$0xff]
  %v339 = vld [vmem:[%s3 + $0x8] sm:$0xff]
  %v340 = vld [vmem:[%s3 + $0x10] sm:$0xff]
  %v341 = vld [vmem:[%s3 + $0x18] sm:$0xff]
  %v342 = vld [vmem:[%s3 + $0x20] sm:$0xff]
  %v343 = vld [vmem:[%s3 + $0x28] sm:$0xff]
  %v344 = vld [vmem:[%s3 + $0x30] sm:$0xff]
  %v345 = vld [vmem:[%s3 + $0x38] sm:$0xff]
  %v346 = vld [vmem:[%s3 + $0x40] sm:$0xff]
  %v347 = vld [vmem:[%s3 + $0x48] sm:$0xff]
  %v348 = vld [vmem:[%s3 + $0x50] sm:$0xff]
  %v349 = vld [vmem:[%s3 + $0x58] sm:$0xff]
  %v350 = vld [vmem:[%s3 + $0x60] sm:$0xff]
  %v351 = vld [vmem:[%s3 + $0x68] sm:$0xff]
  %v352 = vld [vmem:[%s3 + $0x70] sm:$0xff]
  %v353 = vld [vmem:[%s3 + $0x78] sm:$0xff]
  %354 = vmatpush.msra.mxu0 %v353
  %355 = vmatpush.msra.mxu0 %v352
  %356 = vmatpush.msra.mxu0 %v351
  %357 = vmatpush.msra.mxu0 %v350
  %358 = vmatpush.msra.mxu0 %v349
  %359 = vmatpush.msra.mxu0 %v348
  %360 = vmatpush.msra.mxu0 %v347
  %361 = vmatpush.msra.mxu0 %v346
  %362 = vmatpush.msra.mxu0 %v345
  %363 = vmatpush.msra.mxu0 %v344
  %364 = vmatpush.msra.mxu0 %v343
  %365 = vmatpush.msra.mxu0 %v342
  %366 = vmatpush.msra.mxu0 %v341
  %367 = vmatpush.msra.mxu0 %v340
  %368 = vmatpush.msra.mxu0 %v339
  %369 = vmatpush.msra.mxu0 %v338
  %370 = vmatmul.f32.gmra.mxu0 %v336
  %v371 = vpop.f32.mrf.mxu0
  %v372 = vadd.f32 0.0, %v371
  %373 = vdwg.mxu0
  %v374 = vmul.f32 %v336, %v336
  %v375 = vld [vmem:[%s4] sm:$0xff]
  %v376 = vld [vmem:[%s4 + $0x8] sm:$0xff]
  %v377 = vld [vmem:[%s4 + $0x10] sm:$0xff]
  %v378 = vld [vmem:[%s4 + $0x18] sm:$0xff]
  %v379 = vld [vmem:[%s4 + $0x20] sm:$0xff]
  %v380 = vld [vmem:[%s4 + $0x28] sm:$0xff]
  %v381 = vld [vmem:[%s4 + $0x30] sm:$0xff]
  %v382 = vld [vmem:[%s4 + $0x38] sm:$0xff]
  %v383 = vld [vmem:[%s4 + $0x40] sm:$0xff]
  %v384 = vld [vmem:[%s4 + $0x48] sm:$0xff]
  %v385 = vld [vmem:[%s4 + $0x50] sm:$0xff]
  %v386 = vld [vmem:[%s4 + $0x58] sm:$0xff]
  %v387 = vld [vmem:[%s4 + $0x60] sm:$0xff]
  %v388 = vld [vmem:[%s4 + $0x68] sm:$0xff]
  %v389 = vld [vmem:[%s4 + $0x70] sm:$0xff]
  %v390 = vld [vmem:[%s4 + $0x78] sm:$0xff]
  %391 = vmatpush.msra.mxu0 %v390
  %392 = vmatpush.msra.mxu0 %v389
  %393 = vmatpush.msra.mxu0 %v388
  %394 = vmatpush.msra.mxu0 %v387
  %395 = vmatpush.msra.mxu0 %v386
  %396 = vmatpush.msra.mxu0 %v385
  %397 = vmatpush.msra.mxu0 %v384
  %398 = vmatpush.msra.mxu0 %v383
  %399 = vmatpush.msra.mxu0 %v382
  %400 = vmatpush.msra.mxu0 %v381
  %401 = vmatpush.msra.mxu0 %v380
  %402 = vmatpush.msra.mxu0 %v379
  %403 = vmatpush.msra.mxu0 %v378
  %404 = vmatpush.msra.mxu0 %v377
  %405 = vmatpush.msra.mxu0 %v376
  %406 = vmatpush.msra.mxu0 %v375
  %407 = vmatmul.f32.gmra.mxu0 %v374
  %v408 = vpop.f32.mrf.mxu0
  %v409 = vadd.f32 0.0, %v408
  %410 = vdwg.mxu0
  %v411 = vld [vmem:[%s5] sm:$0x1]
  %v413 = vperm.slane %v411, 0
  %v415 = vadd.f32 %v409, %v413
  %v416 = vmul.f32 %v372, 2.0
  %v417 = vsub.f32 %v415, %v416
  %v418 = vlaneseq
  %v419 = vand.u32 %v418, 127
  %vm420 = vcmp.lt.s32.totalorder %v419, 16
  %vm421 = vcmp.ge.s32.totalorder %v419, 16
  %vm422 = vcmp.lt.s32.totalorder %v419, 20
  %vm423 = vmand %vm421, %vm422
  %vm424 = vcmp.ge.s32.totalorder %v419, 20
  %vm425 = vcmp.lt.s32.totalorder %v419, 26
  %vm426 = vmand %vm424, %vm425
  %vm427 = vcmp.ge.s32.totalorder %v419, 26
  %vm428 = vcmp.lt.s32.totalorder %v419, 31
  %vm429 = vmand %vm427, %vm428
  %v430 = vld [vmem:[%s8] sm:$0xff]
  %v431 = vsub.f32 0.0, %v417
  %v432 = vsel %vm420, %v431, -1e+30
  %433 = vmax.xlane.f32.xlu0 %v432
  %v434 = vpop.xlane.xlu0 %433
  %v435 = vsub.f32 %v432, %v434
  %v436 = vmul.f32 %v435, 1.442695
  %v437 = vpow.pop %v436
  %v438 = vsel %vm420, %v437, 0.0
  %439 = vadd.xlane.f32.xlu0 %v438
  %v440 = vpop.xlane.xlu0 %439
  %v441 = vlog2.pop %v440
  %v442 = vmul.f32 %v441, 0.6931472
  %v443 = vadd.f32 %v434, %v442
  %v444 = vmul.f32 %v430, %v431
  %v445 = vsel %vm420, %v444, 0.0
  %446 = vadd.xlane.f32.xlu0 %v445
  %v447 = vpop.xlane.xlu0 %446
  %v448 = vsub.f32 %v443, %v447
  %v449 = vld [vmem:[%s6] sm:$0xff]
  %v450 = vld [vmem:[%s6 + $0x8] sm:$0xff]
  %v451 = vld [vmem:[%s6 + $0x10] sm:$0xff]
  %v452 = vld [vmem:[%s6 + $0x18] sm:$0xff]
  %v453 = vld [vmem:[%s6 + $0x20] sm:$0xff]
  %v454 = vld [vmem:[%s6 + $0x28] sm:$0xff]
  %v455 = vld [vmem:[%s6 + $0x30] sm:$0xff]
  %v456 = vld [vmem:[%s6 + $0x38] sm:$0xff]
  %v457 = vld [vmem:[%s6 + $0x40] sm:$0xff]
  %v458 = vld [vmem:[%s6 + $0x48] sm:$0xff]
  %v459 = vld [vmem:[%s6 + $0x50] sm:$0xff]
  %v460 = vld [vmem:[%s6 + $0x58] sm:$0xff]
  %v461 = vld [vmem:[%s6 + $0x60] sm:$0xff]
  %v462 = vld [vmem:[%s6 + $0x68] sm:$0xff]
  %v463 = vld [vmem:[%s6 + $0x70] sm:$0xff]
  %v464 = vld [vmem:[%s6 + $0x78] sm:$0xff]
  %465 = vmatpush.msra.mxu0 %v464
  %466 = vmatpush.msra.mxu0 %v463
  %467 = vmatpush.msra.mxu0 %v462
  %468 = vmatpush.msra.mxu0 %v461
  %469 = vmatpush.msra.mxu0 %v460
  %470 = vmatpush.msra.mxu0 %v459
  %471 = vmatpush.msra.mxu0 %v458
  %472 = vmatpush.msra.mxu0 %v457
  %473 = vmatpush.msra.mxu0 %v456
  %474 = vmatpush.msra.mxu0 %v455
  %475 = vmatpush.msra.mxu0 %v454
  %476 = vmatpush.msra.mxu0 %v453
  %477 = vmatpush.msra.mxu0 %v452
  %478 = vmatpush.msra.mxu0 %v451
  %479 = vmatpush.msra.mxu0 %v450
  %480 = vmatpush.msra.mxu0 %v449
  %481 = vmatmul.f32.gmra.mxu0 %v336
  %v482 = vpop.f32.mrf.mxu0
  %v483 = vadd.f32 0.0, %v482
  %484 = vdwg.mxu0
  %v485 = vld [vmem:[%s7] sm:$0x1]
  %487 = vset.pattern.permute.xlu0 0
  %488 = vperm.xlu0 %487, %v409
  %v489 = vpop.permute.xlu0 %488
  %v492 = vperm.slane %v485, 0
  %v494 = vadd.f32 %v489, %v492
  %v495 = vmul.f32 %v483, 2.0
  %v496 = vsub.f32 %v494, %v495
  %v497 = vsub.f32 0.0, %v496
  %vm498 = vcmask 64512
  %v499 = vsel %vm498, %v497, -inf
  %500 = vmax.xlane.f32.xlu0 %v499
  %v501 = vpop.xlane.xlu0 %500
  %v502 = vsub.f32 %v497, %v501
  %v503 = vmul.f32 %v502, 1.442695
  %v504 = vpow.pop %v503
  %v505 = vsel %vm498, %v504, 0.0
  %506 = vadd.xlane.f32.xlu0 %v505
  %v507 = vpop.xlane.xlu0 %506
  %v508 = vlog2.pop %v507
  %v509 = vmul.f32 %v508, 0.6931472
  %v510 = vadd.f32 %v501, %v509
  %v511 = vld [vmem:[%s9] sm:$0xff]
  %v512 = vmul.f32 %v511, %v497
  %v513 = vsel %vm498, %v512, 0.0
  %514 = vadd.xlane.f32.xlu0 %v513
  %v515 = vpop.xlane.xlu0 %514
  %v516 = vsub.f32 %v510, %v515
  %v517 = vsel %vm423, %v417, -1e+30
  %518 = vmax.xlane.f32.xlu0 %v517
  %v519 = vpop.xlane.xlu0 %518
  %v520 = vsub.f32 %v517, %v519
  %v521 = vmul.f32 %v520, 1.442695
  %v522 = vpow.pop %v521
  %v523 = vsel %vm423, %v522, 0.0
  %524 = vadd.xlane.f32.xlu0 %v523
  %v525 = vpop.xlane.xlu0 %524
  %v526 = vlog2.pop %v525
  %v527 = vmul.f32 %v526, 0.6931472
  %v528 = vadd.f32 %v519, %v527
  %v529 = vmul.f32 %v430, %v417
  %v530 = vsel %vm423, %v529, 0.0
  %531 = vadd.xlane.f32.xlu0 %v530
  %v532 = vpop.xlane.xlu0 %531
  %v533 = vsub.f32 %v528, %v532
  %v534 = vld [vmem:[%s10] sm:$0xff]
  %v535 = vmul.f32 %v534, %v533
  %v536 = vadd.f32 %v535, 0.0
  %v537 = vsel %vm426, %v417, -1e+30
  %538 = vmax.xlane.f32.xlu0 %v537
  %v539 = vpop.xlane.xlu0 %538
  %v540 = vsub.f32 %v537, %v539
  %v541 = vmul.f32 %v540, 1.442695
  %v542 = vpow.pop %v541
  %v543 = vsel %vm426, %v542, 0.0
  %544 = vadd.xlane.f32.xlu0 %v543
  %v545 = vpop.xlane.xlu0 %544
  %v546 = vlog2.pop %v545
  %v547 = vmul.f32 %v546, 0.6931472
  %v548 = vadd.f32 %v539, %v547
  %v549 = vsel %vm426, %v529, 0.0
  %550 = vadd.xlane.f32.xlu0 %v549
  %v551 = vpop.xlane.xlu0 %550
  %v552 = vsub.f32 %v548, %v551
  %s553 = scalar_lea.vmem %s10, 8
  %v554 = vld [vmem:[%s553] sm:$0xff]
  %v555 = vmul.f32 %v554, %v552
  %v556 = vadd.f32 %v536, %v555
  %v557 = vsel %vm429, %v417, -1e+30
  %558 = vmax.xlane.f32.xlu0 %v557
  %v559 = vpop.xlane.xlu0 %558
  %v560 = vsub.f32 %v557, %v559
  %v561 = vmul.f32 %v560, 1.442695
  %v562 = vpow.pop %v561
  %v563 = vsel %vm429, %v562, 0.0
  %564 = vadd.xlane.f32.xlu0 %v563
  %v565 = vpop.xlane.xlu0 %564
  %v566 = vlog2.pop %v565
  %v567 = vmul.f32 %v566, 0.6931472
  %v568 = vadd.f32 %v559, %v567
  %v569 = vsel %vm429, %v529, 0.0
  %570 = vadd.xlane.f32.xlu0 %v569
  %v571 = vpop.xlane.xlu0 %570
  %v572 = vsub.f32 %v568, %v571
  %s573 = scalar_lea.vmem %s10, 16
  %v574 = vld [vmem:[%s573] sm:$0xff]
  %v575 = vmul.f32 %v574, %v572
  %v576 = vadd.f32 %v556, %v575
  %v577 = vrsqrt.pop %v409
  %v578 = vmul.f32 %v577, %v409
  %v579 = vmul.f32 %v578, %v577
  %v580 = vmul.f32 0.5, %v579
  %v581 = vsub.f32 1.5, %v580
  %v582 = vmul.f32 %v577, %v581
  %v583 = vmul.f32 %v409, %v582
  %vm584 = vcmp.eq.f32.partialorder %v409, inf
  %v585 = vsel %vm584, %v409, %v583
  %vm586 = vcmp.eq.f32.partialorder %v409, 0.0
  %v587 = vand.u32 %v409, 2147483648
  %v588 = vsel %vm586, %v587, %v585
  %vm589 = vcmp.eq.s32.totalorder %v419, 0
  %v590 = vsel %vm589, %v448, 0.0
  %vm591 = vcmp.eq.s32.totalorder %v419, 1
  %v592 = vsel %vm591, %v516, 0.0
  %v593 = vadd.f32 %v590, %v592
  %vm594 = vcmp.eq.s32.totalorder %v419, 2
  %596 = vset.pattern.permute.xlu0 0
  %597 = vperm.xlu0 %596, %v576
  %v598 = vpop.permute.xlu0 %597
  %v600 = vsel %vm594, %v598, 0.0
  %v601 = vadd.f32 %v593, %v600
  %vm602 = vcmp.eq.s32.totalorder %v419, 3
  %604 = vset.pattern.permute.xlu0 0
  %605 = vperm.xlu0 %604, %v588
  %v606 = vpop.permute.xlu0 %605
  %v608 = vsel %vm602, %v606, 0.0
  %v609 = vadd.f32 %v601, %v608
  %v611 = vsel %vm498, 0.125, 0
  %613 = vmatpush.msra.mxu0 0.0
  %614 = vmatpush.msra.mxu0 0.0
  %615 = vmatpush.msra.mxu0 0.0
  %616 = vmatpush.msra.mxu0 0.0
  %617 = vmatpush.msra.mxu0 0.0
  %618 = vmatpush.msra.mxu0 0.0
  %619 = vmatpush.msra.mxu0 0.0
  %620 = vmatpush.msra.mxu0 0.0
  %621 = vmatpush.msra.mxu0 0.0
  %622 = vmatpush.msra.mxu0 0.0
  %623 = vmatpush.msra.mxu0 0.0
  %624 = vmatpush.msra.mxu0 0.0
  %625 = vmatpush.msra.mxu0 0.0
  %626 = vmatpush.msra.mxu0 0.0
  %627 = vmatpush.msra.mxu0 0.0
  %628 = vmatpush.msra.mxu0 %v609
  %629 = vmatmul.f32.gmra.mxu0 %v611
  %v630 = vpop.f32.mrf.mxu0
  %v631 = vadd.f32 0.0, %v630
  %632 = vdwg.mxu0
  %633 = vst [vmem:[%s11] sm:$0x1] %v631
  // Predicated region
  $region46: #{coop_proxy_loss_forward.1} parent=0 // pred_check
    _
  $region47: #{coop_proxy_loss_forward.1} parent=0 // pred_check_branch
    %635 = sbr.rel (0) target = $region49
  $region48: #{coop_proxy_loss_forward.1} parent=0 // pred_region
    _
  $region49: #{coop_proxy_loss_forward.1} parent=0 // pred_fallthru
    _
  // Predicated region
  $region50: #{coop_proxy_loss_forward.1} parent=0 // pred_check
    _
  $region51: #{coop_proxy_loss_forward.1} parent=0 // pred_check_branch
    %637 = sbr.rel (0) target = $region53
  $region52: #{coop_proxy_loss_forward.1} parent=0 // pred_region
    _
  $region53: #{coop_proxy_loss_forward.1} parent=0 // pred_fallthru
    _

</llo_original>
